<compile_context>
chip_gen: v7x
topology: tpu7x:2x2x1
jax: 0.10.0
libtpu: 0.0.40
codegen_flags: <defaults>
</compile_context>

<pallas_src>
import functools

import jax
import jax.numpy as jnp
from jax.experimental import pallas as pl
from jax.experimental.pallas import tpu as pltpu


def _unet_down_kernel(x_ref, w_ref, o_ref, yacc_ref, ssum_ref, *,
                      tile_rows, wo, cout, inv_p, normalize):
    # x_ref:    (1, (Ho+1)*Wo, 8*Cin) bf16  resident per-image space-to-depth block
    # w_ref:    (2, 8*Cin, Cp)        bf16  folded conv weights (index = row parity qi)
    # o_ref:    (1, Cout, Ho*Wo)      f32   final output, written once on the last p step
    # yacc_ref: (Ho*Wo, Cp)           f32   per-image un-normalized conv output (VMEM scratch)
    # ssum_ref: (1, Cp)               f32   streamed per-channel sums (for the mean)
    p = pl.program_id(1)
    row0 = p * tile_rows
    if tile_rows % 8 == 0:
        row0 = pl.multiple_of(row0, 8)

    # Two contiguous-LHS MXU matmuls (qi = 0 / 1 row parity), accumulated into the scratch ref.
    lhs0 = x_ref[0, pl.ds(row0, tile_rows), :]
    lhs1 = x_ref[0, pl.ds(row0 + wo, tile_rows), :]
    yacc_ref[pl.ds(row0, tile_rows), :] = jnp.dot(
        lhs0, w_ref[0], preferred_element_type=jnp.float32)
    yacc_ref[pl.ds(row0, tile_rows), :] += jnp.dot(
        lhs1, w_ref[1], preferred_element_type=jnp.float32)

    if normalize:
        @pl.when(p == 0)
        def _():
            ssum_ref[...] = jnp.zeros_like(ssum_ref)

        tile = yacc_ref[pl.ds(row0, tile_rows), :]
        ssum_ref[...] += jnp.sum(tile, axis=0, keepdims=True)

    @pl.when(p == pl.num_programs(1) - 1)
    def _():
        y = yacc_ref[...]                                       # (P, Cp) f32, fully resident
        if normalize:
            mean = ssum_ref[...] * inv_p                        # (1, Cp)
            c = y - mean
            var = jnp.sum(c * c, axis=0, keepdims=True) * inv_p  # two-pass (biased) variance
            yn = c * jax.lax.rsqrt(var + 1e-5)
        else:
            yn = y
        act = jnp.where(yn >= 0, yn, 0.2 * yn)                  # LeakyReLU(0.2)
        yt = jnp.transpose(act)[:cout]                          # (Cout, Ho*Wo) channel-major
        o_ref[...] = yt[None].astype(o_ref.dtype)


def unet_down_loc(x, weight, *, normalize=True, dropout=0.0):
    """x: (N, Cin, H, W) f32, weight: (Cout, Cin, 4, 4).  Returns (N, Cout, H//2, W//2)."""
    # TODO(synk): dropout > 0 (module default is 0.0) is not implemented.
    assert dropout == 0.0
    N, Cin, H, W = x.shape
    Cout = weight.shape[0]
    assert weight.shape == (Cout, Cin, 4, 4)
    assert H % 2 == 0 and W % 2 == 0
    Ho, Wo = H // 2, W // 2
    P = Ho * Wo
    C8 = 8 * Cin                                     # folded (qj, a, b, ci) channels
    Cp = ((Cout + 127) // 128) * 128                 # lane padding: VMEM / MXU only

    # ---- XLA glue: pad + space-to-depth + column-parity fold (fused layout copies) ----
    xp = jnp.pad(x, ((0, 0), (0, 0), (1, 1), (1, 1)))            # (N, Cin, H+2, W+2)
    xp = xp.transpose(0, 2, 3, 1)                                # NHWC
    s2d = xp.reshape(N, Ho + 1, 2, Wo + 1, 2, Cin)               # rows->(u,a), cols->(v,b)
    s2d = s2d.transpose(0, 1, 3, 2, 4, 5).reshape(N, Ho + 1, Wo + 1, 4 * Cin)
    s2d_wide = jnp.concatenate([s2d[:, :, :Wo, :], s2d[:, :, 1:, :]], axis=-1)
    xw = s2d_wide.reshape(N, (Ho + 1) * Wo, C8).astype(jnp.bfloat16)

    # folded weights: w2[qi, (qj,a,b,ci), co] with kh = 2*qi + a, kw = 2*qj + b
    w6 = weight.reshape(Cout, Cin, 2, 2, 2, 2)                   # (co, ci, qi, a, qj, b)
    w2 = w6.transpose(2, 4, 3, 5, 1, 0).reshape(2, C8, Cout)
    w2 = jnp.pad(w2, ((0, 0), (0, 0), (0, Cp - Cout))).astype(jnp.bfloat16)

    # ---- row tile: largest divisor of Ho with <= ~1024 output rows per step ----
    target = 1024
    cand = [d for d in range(1, Ho + 1) if Ho % d == 0 and d * Wo <= target]
    th = max(cand) if cand else 1
    if th * Wo < max(256, target // 4) and P <= 4096:
        th = Ho                                       # avoid pathological tiny tiles
    PT = Ho // th
    tile_rows = th * Wo

    # ---- VMEM budget estimate (double-buffered blocks + scratch) ----
    def _pad(v, m):
        return ((v + m - 1) // m) * m
    est = (2 * _pad((Ho + 1) * Wo, 8) * _pad(C8, 128) * 2        # resident x block (bf16)
           + 2 * 2 * _pad(C8, 8) * Cp * 2                        # weights (bf16)
           + _pad(P, 8) * Cp * 4                                 # yacc scratch (f32)
           + 2 * _pad(Cout, 8) * _pad(P, 128) * 4                # output block (f32)
           + 8 * Cp * 4)                                         # stats scratch
    vmem_limit = int(min(80 * 2**20, max(32 * 2**20, 2 * est)))
    # TODO(synk): for very large images on v7x (64 MiB VMEM) the resident per-image block should
    # switch to a manually double-buffered (th+1)-row halo slab (memory_space=pl.ANY).

    kern = functools.partial(_unet_down_kernel, tile_rows=tile_rows, wo=Wo, cout=Cout,
                             inv_p=1.0 / float(P), normalize=normalize)

    out = pl.pallas_call(
        kern,
        out_shape=jax.ShapeDtypeStruct((N, Cout, P), jnp.float32),
        grid=(N, PT),
        in_specs=[
            pl.BlockSpec((1, (Ho + 1) * Wo, C8), lambda n, p: (n, 0, 0)),   # resident per image
            pl.BlockSpec((2, C8, Cp), lambda n, p: (0, 0, 0)),              # weights, resident
        ],
        out_specs=pl.BlockSpec((1, Cout, P), lambda n, p: (n, 0, 0)),       # written once per n
        scratch_shapes=[
            pltpu.VMEM((P, Cp), jnp.float32),     # per-image un-normalized conv output
            pltpu.VMEM((1, Cp), jnp.float32),     # per-channel sums
        ],
        compiler_params=pltpu.CompilerParams(
            dimension_semantics=("parallel", "arbitrary"),
            vmem_limit_bytes=vmem_limit,
        ),
    )(xw, w2)

    # free bitcast back to NCHW (no extra HBM pass)
    return out.reshape(N, Cout, Ho, Wo).astype(x.dtype)


if __name__ == "__main__":
    N, Cin, H, W = 2, 4, 16, 16
    Cout = 8

    key = jax.random.PRNGKey(0)
    kx, kw = jax.random.split(key)
    x = jax.random.normal(kx, (N, Cin, H, W), dtype=jnp.float32)
    fan_in = Cin * 4 * 4
    weight = jax.random.normal(kw, (Cout, Cin, 4, 4), dtype=jnp.float32) * (1.0 / fan_in) ** 0.5

    y = jax.block_until_ready(unet_down_loc(x, weight))
    assert y.shape == (N, Cout, H // 2, W // 2)

    # f32 XLA reference: conv -> InstanceNorm2d(affine=False, eps=1e-5) -> LeakyReLU(0.2)
    yc = jax.lax.conv_general_dilated(
        x, weight, window_strides=(2, 2), padding=((1, 1), (1, 1)),
        dimension_numbers=("NCHW", "OIHW", "NCHW"))
    m = yc.mean(axis=(2, 3), keepdims=True)
    v = ((yc - m) ** 2).mean(axis=(2, 3), keepdims=True)
    yn = (yc - m) * jax.lax.rsqrt(v + 1e-5)
    ref = jnp.where(yn >= 0, yn, 0.2 * yn)

    err = float(jnp.max(jnp.abs(y - ref)))
    assert err < 0.1, f"max abs err too large: {err}"   # bf16 conv operands vs f32 reference
    print("KERNEL_OK")
</pallas_src>

<mosaic_0001>
module attributes {stable_mosaic.version = 11 : i64} {
  func.func @_unet_down_kernel(%arg0: i32, %arg1: i32, %arg2: memref<1x72x32xbf16, #tpu.memory_space<vmem>>, %arg3: memref<2x32x128xbf16, #tpu.memory_space<vmem>>, %arg4: memref<1x8x64xf32, #tpu.memory_space<vmem>>, %arg5: memref<64x128xf32, #tpu.memory_space<vmem>>, %arg6: memref<1x128xf32, #tpu.memory_space<vmem>>) attributes {dimension_semantics = [#tpu.dimension_semantics<parallel>, #tpu.dimension_semantics<arbitrary>], iteration_bounds = array<i64: 2, 1>, scalar_prefetch = 0 : i64, scratch_operands = 2 : i64, tpu.core_type = #tpu.core_type<tc>, window_params = [{transform_indices = @transform_0, window_bounds = array<i64: 1, 72, 32>}, {pipeline_mode = #tpu.pipeline_mode<synchronous>, transform_indices = @transform_1, window_bounds = array<i64: 2, 32, 128>}, {transform_indices = @transform_2, window_bounds = array<i64: 1, 8, 64>}]} {
    %c64_i32 = arith.constant 64 : i32
    %0 = arith.muli %arg1, %c64_i32 : i32
    %1 = tpu.assume_multiple %0, 8 : i32
    %c0 = arith.constant 0 : index
    %2 = arith.index_cast %1 : i32 to index
    %c0_0 = arith.constant 0 : index
    %3 = vector.load %arg2[%c0, %2, %c0_0] : memref<1x72x32xbf16, #tpu.memory_space<vmem>>, vector<1x64x32xbf16>
    %4 = vector.shape_cast %3 : vector<1x64x32xbf16> to vector<64x32xbf16>
    %c8_i32 = arith.constant 8 : i32
    %5 = arith.addi %1, %c8_i32 : i32
    %c0_1 = arith.constant 0 : index
    %6 = arith.index_cast %5 : i32 to index
    %c0_2 = arith.constant 0 : index
    %7 = vector.load %arg2[%c0_1, %6, %c0_2] : memref<1x72x32xbf16, #tpu.memory_space<vmem>>, vector<1x64x32xbf16>
    %8 = vector.shape_cast %7 : vector<1x64x32xbf16> to vector<64x32xbf16>
    %c0_3 = arith.constant 0 : index
    %c0_4 = arith.constant 0 : index
    %c0_5 = arith.constant 0 : index
    %9 = vector.load %arg3[%c0_3, %c0_4, %c0_5] : memref<2x32x128xbf16, #tpu.memory_space<vmem>>, vector<1x32x128xbf16>
    %10 = vector.shape_cast %9 : vector<1x32x128xbf16> to vector<32x128xbf16>
    %cst = arith.constant dense<0.000000e+00> : vector<64x128xf32>
    %11 = tpu.matmul %4, %10, %cst {dimension_numbers = #tpu.dot_dimension_numbers<[1], [0], [0], [1], [0, 0, 1, 1], [], []>} : vector<64x32xbf16>, vector<32x128xbf16>, vector<64x128xf32> -> vector<64x128xf32>
    %12 = arith.index_cast %1 : i32 to index
    %c0_6 = arith.constant 0 : index
    %13 = vector.load %arg5[%12, %c0_6] : memref<64x128xf32, #tpu.memory_space<vmem>>, vector<64x128xf32>
    tpu.vector_store %arg5[%12, %c0_6], %11 {strides = array<i32>} : memref<64x128xf32, #tpu.memory_space<vmem>>, vector<64x128xf32>,
    %14 = arith.index_cast %1 : i32 to index
    %c0_7 = arith.constant 0 : index
    %15 = vector.load %arg5[%14, %c0_7] : memref<64x128xf32, #tpu.memory_space<vmem>>, vector<64x128xf32>
    %c1 = arith.constant 1 : index
    %c0_8 = arith.constant 0 : index
    %c0_9 = arith.constant 0 : index
    %16 = vector.load %arg3[%c1, %c0_8, %c0_9] : memref<2x32x128xbf16, #tpu.memory_space<vmem>>, vector<1x32x128xbf16>
    %17 = vector.shape_cast %16 : vector<1x32x128xbf16> to vector<32x128xbf16>
    %cst_10 = arith.constant dense<0.000000e+00> : vector<64x128xf32>
    %18 = tpu.matmul %8, %17, %cst_10 {dimension_numbers = #tpu.dot_dimension_numbers<[1], [0], [0], [1], [0, 0, 1, 1], [], []>} : vector<64x32xbf16>, vector<32x128xbf16>, vector<64x128xf32> -> vector<64x128xf32>
    %19 = arith.addf %15, %18 : vector<64x128xf32>
    %20 = arith.index_cast %1 : i32 to index
    %c0_11 = arith.constant 0 : index
    %21 = vector.load %arg5[%20, %c0_11] : memref<64x128xf32, #tpu.memory_space<vmem>>, vector<64x128xf32>
    tpu.vector_store %arg5[%20, %c0_11], %19 {strides = array<i32>} : memref<64x128xf32, #tpu.memory_space<vmem>>, vector<64x128xf32>,
    %c0_i32 = arith.constant 0 : i32
    %22 = arith.cmpi eq, %arg1, %c0_i32 : i32
    %23 = arith.extui %22 : i1 to i32
    %c0_i32_12 = arith.constant 0 : i32
    %24 = arith.cmpi ne, %23, %c0_i32_12 : i32
    scf.if %24 {
      %cst_21 = arith.constant 0.000000e+00 : f32
      %35 = vector.broadcast %cst_21 : f32 to vector<1x128xf32>
      %c0_22 = arith.constant 0 : index
      %c0_23 = arith.constant 0 : index
      %36 = vector.load %arg6[%c0_22, %c0_23] : memref<1x128xf32, #tpu.memory_space<vmem>>, vector<1x128xf32>
      tpu.vector_store %arg6[%c0_22, %c0_23], %35 {strides = array<i32>} : memref<1x128xf32, #tpu.memory_space<vmem>>, vector<1x128xf32>,
    } else {
    }
    %25 = arith.index_cast %1 : i32 to index
    %c0_13 = arith.constant 0 : index
    %26 = vector.load %arg5[%25, %c0_13] : memref<64x128xf32, #tpu.memory_space<vmem>>, vector<64x128xf32>
    %c0_14 = arith.constant 0 : index
    %c0_15 = arith.constant 0 : index
    %27 = vector.load %arg6[%c0_14, %c0_15] : memref<1x128xf32, #tpu.memory_space<vmem>>, vector<1x128xf32>
    %cst_16 = arith.constant dense<0.000000e+00> : vector<128xf32>
    %28 = vector.multi_reduction <add>, %26, %cst_16 [0] : vector<64x128xf32> to vector<128xf32>
    %29 = vector.shape_cast %28 : vector<128xf32> to vector<1x128xf32>
    %30 = arith.addf %27, %29 : vector<1x128xf32>
    %c0_17 = arith.constant 0 : index
    %c0_18 = arith.constant 0 : index
    %31 = vector.load %arg6[%c0_17, %c0_18] : memref<1x128xf32, #tpu.memory_space<vmem>>, vector<1x128xf32>
    tpu.vector_store %arg6[%c0_17, %c0_18], %30 {strides = array<i32>} : memref<1x128xf32, #tpu.memory_space<vmem>>, vector<1x128xf32>,
    %c0_i32_19 = arith.constant 0 : i32
    %32 = arith.cmpi eq, %arg1, %c0_i32_19 : i32
    %33 = arith.extui %32 : i1 to i32
    %c0_i32_20 = arith.constant 0 : i32
    %34 = arith.cmpi ne, %33, %c0_i32_20 : i32
    scf.if %34 {
      %c0_21 = arith.constant 0 : index
      %c0_22 = arith.constant 0 : index
      %35 = vector.load %arg5[%c0_21, %c0_22] : memref<64x128xf32, #tpu.memory_space<vmem>>, vector<64x128xf32>
      %c0_23 = arith.constant 0 : index
      %c0_24 = arith.constant 0 : index
      %36 = vector.load %arg6[%c0_23, %c0_24] : memref<1x128xf32, #tpu.memory_space<vmem>>, vector<1x128xf32>
      %cst_25 = arith.constant 1.562500e-02 : f32
      %37 = vector.broadcast %cst_25 : f32 to vector<1x128xf32>
      %38 = arith.mulf %36, %37 : vector<1x128xf32>
      %39 = vector.broadcast %38 : vector<1x128xf32> to vector<64x128xf32>
      %40 = arith.subf %35, %39 : vector<64x128xf32>
      %41 = arith.mulf %40, %40 : vector<64x128xf32>
      %cst_26 = arith.constant dense<0.000000e+00> : vector<128xf32>
      %42 = vector.multi_reduction <add>, %41, %cst_26 [0] : vector<64x128xf32> to vector<128xf32>
      %43 = vector.shape_cast %42 : vector<128xf32> to vector<1x128xf32>
      %cst_27 = arith.constant 1.562500e-02 : f32
      %44 = vector.broadcast %cst_27 : f32 to vector<1x128xf32>
      %45 = arith.mulf %43, %44 : vector<1x128xf32>
      %cst_28 = arith.constant 9.99999974E-6 : f32
      %46 = vector.broadcast %cst_28 : f32 to vector<1x128xf32>
      %47 = arith.addf %45, %46 : vector<1x128xf32>
      %48 = math.rsqrt %47 : vector<1x128xf32>
      %49 = vector.broadcast %48 : vector<1x128xf32> to vector<64x128xf32>
      %50 = arith.mulf %40, %49 : vector<64x128xf32>
      %cst_29 = arith.constant 0.000000e+00 : f32
      %51 = vector.broadcast %cst_29 : f32 to vector<64x128xf32>
      %52 = arith.cmpf oge, %50, %51 : vector<64x128xf32>
      %cst_30 = arith.constant 2.000000e-01 : f32
      %53 = vector.broadcast %cst_30 : f32 to vector<64x128xf32>
      %54 = arith.mulf %53, %50 : vector<64x128xf32>
      %55 = arith.select %52, %50, %54 : vector<64x128xi1>, vector<64x128xf32>
      %56 = tpu.transpose %55, [1, 0] : vector<64x128xf32> -> vector<128x64xf32>
      %57 = vector.extract_strided_slice %56 {offsets = [0, 0], sizes = [8, 64], strides = [1, 1]} : vector<128x64xf32> to vector<8x64xf32>
      %58 = vector.shape_cast %57 : vector<8x64xf32> to vector<1x8x64xf32>
      %c0_31 = arith.constant 0 : index
      %c0_32 = arith.constant 0 : index
      %c0_33 = arith.constant 0 : index
      %59 = vector.load %arg4[%c0_31, %c0_32, %c0_33] : memref<1x8x64xf32, #tpu.memory_space<vmem>>, vector<1x8x64xf32>
      tpu.vector_store %arg4[%c0_31, %c0_32, %c0_33], %58 {strides = array<i32>} : memref<1x8x64xf32, #tpu.memory_space<vmem>>, vector<1x8x64xf32>,
    } else {
    }
    return
  }
  func.func @transform_0(%arg0: i32, %arg1: i32) -> (i32, i32, i32) {
    %c0_i32 = arith.constant 0 : i32
    %c0_i32_0 = arith.constant 0 : i32
    %c0_i32_1 = arith.constant 0 : i32
    return %arg0, %c0_i32, %c0_i32_0 : i32, i32, i32
  }
  func.func @transform_1(%arg0: i32, %arg1: i32) -> (i32, i32, i32) {
    %c0_i32 = arith.constant 0 : i32
    %c0_i32_0 = arith.constant 0 : i32
    %c0_i32_1 = arith.constant 0 : i32
    %c0_i32_2 = arith.constant 0 : i32
    return %c0_i32, %c0_i32_0, %c0_i32_1 : i32, i32, i32
  }
  func.func @transform_2(%arg0: i32, %arg1: i32) -> (i32, i32, i32) {
    %c0_i32 = arith.constant 0 : i32
    %c0_i32_0 = arith.constant 0 : i32
    %c0_i32_1 = arith.constant 0 : i32
    return %arg0, %c0_i32, %c0_i32_0 : i32, i32, i32
  }
}

</mosaic_0001>

<llo_original>
// kernel: tpu_custom_call.1
$region0: #{tpu_custom_call.1}
  #allocation0 [shape = 'u32[]', space=smem, size = 0x4, offset = 0x4, fixed_abs, tag = 'smem constant byte address 0x4 - core index']
  #allocation1 [shape = 'u32[144,128]{1,0:T(1,128)}', space=vmem, size = 0x12000, scoped, tag = 'internal scratch']
  #allocation2 [shape = 'f32[64,128]{1,0:T(8,128)}', space=vmem, size = 0x8000, scoped, tag = 'scratch operand']
  #allocation3 [shape = 'f32[1,128]{1,0:T(1,128)}', space=vmem, size = 0x200, scoped, tag = 'scratch operand']
  %s0 = inlined_call_operand.vmem [shape: bf16[2,72,32], index: 0, kind: input, shape index: {}]
  %s1 = inlined_call_operand.vmem [shape: bf16[2,32,128], index: 1, kind: input, shape index: {}]
  %s2 = inlined_call_operand.hbm [shape: f32[2,8,64], index: 2, kind: output, shape index: {}]
  %s3 = sld [smem:[#allocation0]]
  $region49: #{tpu_custom_call.1} parent=0
    _
  %s5 = ssub.s32 1, %s3
  %s6 = scalar_select 0, %s5, %s3
  $region1: #{tpu_custom_call.1} parent=0
    #allocation4 [shape = 'u8[8192]{0}', space=vmem, size = 0x2000, scoped, tag = 'output window, operand 0']
    #allocation5 [shape = 's32[2]{0}', space=sflag, size = 0x8, scoped, tag = 'scoped memory for tpu_custom_call.1']
    %7 = vsyncpa [#allocation5], 0
    %s8 = scalar_lea.sflag [#allocation5], 1
    %9 = vsyncpa %s8, 0
    loop: start=0, step=1, limit=4
    $region2: #{tpu_custom_call.1} parent=1 // loop_pre_header
      _
    $region3: #{tpu_custom_call.1} parent=1 // loop_header
      %s11 = sphi 0, %s15
      %p12 = scmp.ge.s32.totalorder %s11, 4
      %s18 = sphi 0, %s30
      %s19 = sphi 0, %s26
      %s20 = sphi 0, %s18
      %s21 = sphi 0, %s19
      %s22 = sphi 0, %s20
      %s23 = sphi 0, %s21
      %s33 = sphi 0, %s35
      %s36 = sphi 0, %s33
      %s37 = sphi 0, %s36
      %s53 = sphi 0, %s37
      %s57 = sphi 0, %s57
      %s59 = sphi 0, %s57
      %s60 = sphi 0, %s59
      %s74 = sphi 0, %s60
      %s80 = sphi 0, %s82
      %s83 = sphi 0, %s80
      %s84 = sphi 0, %s83
      %s100 = sphi 0, %s84
    $region4: #{tpu_custom_call.1} parent=1 // loop_header_branch
      %14 = sbr.rel (%p12) target = $region8
    $region5: #{tpu_custom_call.1} parent=1 // loop_body
      %s16 = ssub.s32 %s11, 1
      %s17 = ssub.s32 %s11, 2
      %s24 = sadd.s32 1, %s19
      %p25 = scmp.ge.s32.totalorder %s24, 1
      %s26 = scalar_select %p25, 0, %s24
      %s27 = sadd.s32 1, %s18
      %s28 = scalar_select %p25, %s27, %s18
      %p29 = scmp.ge.s32.totalorder %s28, 2
      %s30 = scalar_select %p29, 0, %s28
      %s31 = ssub.s32 %s18, %s30
      %p32 = scmp.eq.s32.totalorder %s31, 0
      %s34 = sadd.s32 %s33, 1
      %s35 = scalar_select %p32, %s33, %s34
      %p38 = pneg %p32
      %p39 = scmp.eq.s32.totalorder %s11, 1
      %p40 = por %p38, %p39
      %p41 = scmp.ne.s32.totalorder %s33, %s36
      %p42 = scmp.eq.s32.totalorder %s11, 0
      %p43 = por %p41, %p42
      %p44 = scmp.ne.s32.totalorder %s33, %s36
      %p45 = scmp.eq.s32.totalorder %s16, 1
      %p46 = por %p44, %p45
      %p47 = scmp.ne.s32.totalorder %s36, %s37
      %p48 = scmp.eq.s32.totalorder %s16, 0
      %p49 = por %p47, %p48
      %p50 = scmp.ne.s32.totalorder %s36, %s37
      %p51 = scmp.eq.s32.totalorder %s17, 1
      %p52 = por %p50, %p51
      %p54 = scmp.ne.s32.totalorder %s37, %s53
      %p55 = scmp.eq.s32.totalorder %s17, 0
      %p56 = por %p54, %p55
      %s58 = sadd.s32 %s57, 1
      %p61 = scmp.eq.s32.totalorder %s11, 1
      %p62 = scmp.ne.s32.totalorder %s57, %s59
      %p63 = scmp.eq.s32.totalorder %s11, 0
      %p64 = por %p62, %p63
      %p65 = scmp.ne.s32.totalorder %s57, %s59
      %p66 = scmp.eq.s32.totalorder %s16, 1
      %p67 = por %p65, %p66
      %p68 = scmp.ne.s32.totalorder %s59, %s60
      %p69 = scmp.eq.s32.totalorder %s16, 0
      %p70 = por %p68, %p69
      %p71 = scmp.ne.s32.totalorder %s59, %s60
      %p72 = scmp.eq.s32.totalorder %s17, 1
      %p73 = por %p71, %p72
      %p75 = scmp.ne.s32.totalorder %s60, %s74
      %p76 = scmp.eq.s32.totalorder %s17, 0
      %p77 = por %p75, %p76
      %s78 = ssub.s32 %s18, %s30
      %p79 = scmp.eq.s32.totalorder %s78, 0
      %s81 = sadd.s32 %s80, 1
      %s82 = scalar_select %p79, %s80, %s81
      %p85 = pneg %p79
      %p86 = scmp.eq.s32.totalorder %s11, 1
      %p87 = por %p85, %p86
      %p88 = scmp.ne.s32.totalorder %s80, %s83
      %p89 = scmp.eq.s32.totalorder %s11, 0
      %p90 = por %p88, %p89
      %p91 = scmp.ne.s32.totalorder %s80, %s83
      %p92 = scmp.eq.s32.totalorder %s16, 1
      %p93 = por %p91, %p92
      %p94 = scmp.ne.s32.totalorder %s83, %s84
      %p95 = scmp.eq.s32.totalorder %s16, 0
      %p96 = por %p94, %p95
      %p97 = scmp.ne.s32.totalorder %s83, %s84
      %p98 = scmp.eq.s32.totalorder %s17, 1
      %p99 = por %p97, %p98
      %p101 = scmp.ne.s32.totalorder %s84, %s100
      %p102 = scmp.eq.s32.totalorder %s17, 0
      %p103 = por %p101, %p102
      %p104 = scmp.le.s32.totalorder 1, %s11
      %p105 = scmp.lt.s32.totalorder %s11, 3
      %p106 = pnand %p104, %p105
      %p107 = pneg %p106
      // Predicated region
      $region9: #{tpu_custom_call.1} parent=5 // pred_check
        _
      $region10: #{tpu_custom_call.1} parent=5 // pred_check_branch
        %109 = sbr.rel (%p106) target = $region12
      $region11: #{tpu_custom_call.1} parent=5 // pred_region
        %s110 = ssub.s32 %s11, 1
        // Predicated region
        $region13: #{tpu_custom_call.1} parent=11 // pred_check
          %p111 = pneg %p70
        $region14: #{tpu_custom_call.1} parent=11 // pred_check_branch
          %113 = sbr.rel (%p111) target = $region16
        $region15: #{tpu_custom_call.1} parent=11 // pred_region
          _
        $region16: #{tpu_custom_call.1} parent=11 // pred_fallthru
          _
      $region12: #{tpu_custom_call.1} parent=5 // pred_fallthru
        _
      %p114 = scmp.lt.s32.totalorder %s11, 2
      // Predicated region
      $region17: #{tpu_custom_call.1} parent=5 // pred_check
        %p115 = pneg %p114
      $region18: #{tpu_custom_call.1} parent=5 // pred_check_branch
        %117 = sbr.rel (%p115) target = $region20
      $region19: #{tpu_custom_call.1} parent=5 // pred_region
        // Predicated region
        $region21: #{tpu_custom_call.1} parent=19 // pred_check
          %p118 = pneg %p43
        $region22: #{tpu_custom_call.1} parent=19 // pred_check_branch
          %120 = sbr.rel (%p118) target = $region24
        $region23: #{tpu_custom_call.1} parent=19 // pred_region
          %p121 = scmp.lt.s32.totalorder %s18, 1
          %s122 = scalar_select %p121, %s18, 1
          %s123 = smul.addr %s122, 9
          %s124 = smul.addr %s123, 4
          %s125 = scalar_lea.vmem %s0, %s124
        $region24: #{tpu_custom_call.1} parent=19 // pred_fallthru
          _
      $region20: #{tpu_custom_call.1} parent=5 // pred_fallthru
        _
      %p126 = scmp.le.s32.totalorder 1, %s11
      %p127 = scmp.lt.s32.totalorder %s11, 3
      %p128 = pnand %p126, %p127
      %p129 = pneg %p128
      // Predicated region
      $region25: #{tpu_custom_call.1} parent=5 // pred_check
        _
      $region26: #{tpu_custom_call.1} parent=5 // pred_check_branch
        %131 = sbr.rel (%p128) target = $region28
      $region27: #{tpu_custom_call.1} parent=5 // pred_region
        %s132 = ssub.s32 %s11, 1
        %p133 = scmp.lt.s32.totalorder %s20, 1
        %s134 = scalar_select %p133, %s20, 1
        %s135 = smul.addr %s134, 9
        %s136 = smul.addr %s135, 4
        %s137 = scalar_lea.vmem %s0, %s136
        %p138 = pneg %p49
        %p139 = pneg %p46
        %p140 = pneg %p70
        %p141 = pneg %p67
        %p142 = pneg %p96
        %p143 = pneg %p93
        %s144 = sand.u32 %s83, 1
        %s145 = scalar_lea.sflag [#allocation5], %s144
        %s146 = sand.u32 %s83, 1
        %s147 = smul.addr %s146, 8
        %s148 = scalar_lea.vmem [#allocation4], %s147
        %p149 = scmp.lt.s32.totalorder %s20, 1
        %s150 = scalar_select %p149, %s20, 1
        %s151 = smul.addr %s150, 9
        %s152 = smul.addr %s151, 4
        %s153 = scalar_lea.vmem %s0, %s152
        %s155 = smul.u32 %s21, 64
        %s156 = sshra.s32 %s155, 3
        %s157 = sand.u32 %s155, 7
        %s158 = smul.addr %s156, 4
        %s159 = scalar_lea.vmem %s153, %s158
        %v160 = vld [vmem:[%s159] sm:$0xf]
        %v161 = vld [vmem:[%s159 + $0x4] sm:$0xf]
        %v162 = vld [vmem:[%s159 + $0x8] sm:$0xf]
        %v163 = vld [vmem:[%s159 + $0xc] sm:$0xf]
        %v164 = vld [vmem:[%s159 + $0x10] sm:$0xf]
        %v165 = vld [vmem:[%s159 + $0x14] sm:$0xf]
        %v166 = vld [vmem:[%s159 + $0x18] sm:$0xf]
        %v167 = vld [vmem:[%s159 + $0x1c] sm:$0xf]
        %s168 = sadd.s32 %s155, 8
        %s169 = sshra.s32 %s168, 3
        %s170 = sand.u32 %s168, 7
        %s171 = smul.addr %s169, 4
        %s172 = scalar_lea.vmem %s153, %s171
        %v173 = vld [vmem:[%s172] sm:$0xf]
        %v174 = vld [vmem:[%s172 + $0x4] sm:$0xf]
        %v175 = vld [vmem:[%s172 + $0x8] sm:$0xf]
        %v176 = vld [vmem:[%s172 + $0xc] sm:$0xf]
        %v177 = vld [vmem:[%s172 + $0x10] sm:$0xf]
        %v178 = vld [vmem:[%s172 + $0x14] sm:$0xf]
        %v179 = vld [vmem:[%s172 + $0x18] sm:$0xf]
        %v180 = vld [vmem:[%s172 + $0x1c] sm:$0xf]
        %v181 = vld [vmem:[%s1] sm:$0xf]
        %v182 = vld [vmem:[%s1 + $0x4] sm:$0xf]
        %v183 = vld [vmem:[%s1 + $0x8] sm:$0xf]
        %v184 = vld [vmem:[%s1 + $0xc] sm:$0xf]
        %v193 = vunpack.c.l.b16 %v160
        %v194 = vunpack.c.l.b16 %v161
        %v195 = vunpack.c.l.b16 %v162
        %v196 = vunpack.c.l.b16 %v163
        %v197 = vunpack.c.l.b16 %v164
        %v198 = vunpack.c.l.b16 %v165
        %v199 = vunpack.c.l.b16 %v166
        %v200 = vunpack.c.l.b16 %v167
        %v201 = vpack.c.b16 %v194, %v193
        %v202 = vpack.c.b16 %v196, %v195
        %v203 = vpack.c.b16 %v198, %v197
        %v204 = vpack.c.b16 %v200, %v199
        %v209 = vunpack.c.l.b16 %v181
        %v210 = vunpack.c.l.b16 %v182
        %v211 = vunpack.c.l.b16 %v183
        %v212 = vunpack.c.l.b16 %v184
        %v213 = vpack.c.b16 %v210, %v209
        %v214 = vpack.c.b16 %v212, %v211
        %vm217 = vcmask 261120
        %v219 = vsel %vm217, %v201, 0
        %v222 = vsel %vm217, %v202, 0
        %v225 = vsel %vm217, %v203, 0
        %v228 = vsel %vm217, %v204, 0
        %230 = vmatprep.subr.bf16.mxu0 0
        %231 = vmatpush1.bf16.msra.mxu0 %v213
        %232 = vmatprep.subr.bf16.mxu0 0
        %233 = vmatpush1.bf16.msra.mxu0 %v214
        %234 = vmatprep.subr.bf16.mxu0 0
        %235 = vmatpush1.bf16.msra.mxu0 0
        %236 = vmatprep.subr.bf16.mxu0 0
        %237 = vmatpush1.bf16.msra.mxu0 0
        %238 = vmatprep.subr.bf16.mxu0 0
        %239 = vmatpush1.bf16.msra.mxu0 0
        %240 = vmatprep.subr.bf16.mxu0 0
        %241 = vmatpush1.bf16.msra.mxu0 0
        %242 = vmatprep.subr.bf16.mxu0 0
        %243 = vmatpush1.bf16.msra.mxu0 0
        %244 = vmatprep.subr.bf16.mxu0 0
        %245 = vmatpush1.bf16.msra.mxu0 0
        %246 = vmatprep.subr.bf16.mxu0 0
        %247 = vmatpush1.bf16.msra.mxu0 0
        %248 = vmatprep.subr.bf16.mxu0 0
        %249 = vmatpush1.bf16.msra.mxu0 0
        %250 = vmatprep.subr.bf16.mxu0 0
        %251 = vmatpush1.bf16.msra.mxu0 0
        %252 = vmatprep.subr.bf16.mxu0 0
        %253 = vmatpush1.bf16.msra.mxu0 0
        %254 = vmatprep.subr.bf16.mxu0 0
        %255 = vmatpush1.bf16.msra.mxu0 0
        %256 = vmatprep.subr.bf16.mxu0 0
        %257 = vmatpush1.bf16.msra.mxu0 0
        %258 = vmatprep.subr.bf16.mxu0 0
        %259 = vmatpush1.bf16.msra.mxu0 0
        %260 = vmatprep.subr.bf16.mxu0 0
        %261 = vmatpush1.bf16.msra.mxu0 0
        %262 = vmatprep.mubr.bf16.mxu0 0
        %263 = vmatmul.mubr.bf16.gmra.mrb[0].mxu0 %v219
        %v264 = vpop.f32.mrb[0].mxu0
        %v265 = vadd.f32 0.0, %v264
        %v266 = vpop.f32.mrb[0].mxu0
        %v267 = vpop.f32.mrb[0].mxu0
        %v268 = vadd.f32 0.0, %v267
        %v269 = vpop.f32.mrb[0].mxu0
        %270 = vmatprep.mubr.bf16.mxu0 0
        %271 = vmatmul.mubr.bf16.gmra.mrb[0].mxu0 %v222
        %v272 = vpop.f32.mrb[0].mxu0
        %v273 = vadd.f32 0.0, %v272
        %v274 = vpop.f32.mrb[0].mxu0
        %v275 = vpop.f32.mrb[0].mxu0
        %v276 = vadd.f32 0.0, %v275
        %v277 = vpop.f32.mrb[0].mxu0
        %278 = vmatprep.mubr.bf16.mxu0 0
        %279 = vmatmul.mubr.bf16.gmra.mrb[0].mxu0 %v225
        %v280 = vpop.f32.mrb[0].mxu0
        %v281 = vadd.f32 0.0, %v280
        %v282 = vpop.f32.mrb[0].mxu0
        %v283 = vpop.f32.mrb[0].mxu0
        %v284 = vadd.f32 0.0, %v283
        %v285 = vpop.f32.mrb[0].mxu0
        %286 = vmatprep.mubr.bf16.mxu0 0
        %287 = vmatmul.mubr.bf16.gmra.mrb[0].mxu0 %v228
        %v288 = vpop.f32.mrb[0].mxu0
        %v289 = vadd.f32 0.0, %v288
        %v290 = vpop.f32.mrb[0].mxu0
        %v291 = vpop.f32.mrb[0].mxu0
        %v292 = vadd.f32 0.0, %v291
        %v293 = vpop.f32.mrb[0].mxu0
        %294 = vdwg.mxu0
        %s295 = scalar_lea.vmem [#allocation2], %s155
        %296 = vst [vmem:[%s295] sm:$0xff] %v265
        %297 = vst [vmem:[%s295 + $0x8] sm:$0xff] %v268
        %298 = vst [vmem:[%s295 + $0x10] sm:$0xff] %v273
        %299 = vst [vmem:[%s295 + $0x18] sm:$0xff] %v276
        %300 = vst [vmem:[%s295 + $0x20] sm:$0xff] %v281
        %301 = vst [vmem:[%s295 + $0x28] sm:$0xff] %v284
        %302 = vst [vmem:[%s295 + $0x30] sm:$0xff] %v289
        %303 = vst [vmem:[%s295 + $0x38] sm:$0xff] %v292
        %v304 = vld [vmem:[%s295] sm:$0xff]
        %v305 = vld [vmem:[%s295 + $0x8] sm:$0xff]
        %v306 = vld [vmem:[%s295 + $0x10] sm:$0xff]
        %v307 = vld [vmem:[%s295 + $0x18] sm:$0xff]
        %v308 = vld [vmem:[%s295 + $0x20] sm:$0xff]
        %v309 = vld [vmem:[%s295 + $0x28] sm:$0xff]
        %v310 = vld [vmem:[%s295 + $0x30] sm:$0xff]
        %v311 = vld [vmem:[%s295 + $0x38] sm:$0xff]
        %s312 = scalar_lea.vmem %s1, 16
        %v313 = vld [vmem:[%s312] sm:$0xf]
        %v314 = vld [vmem:[%s312 + $0x4] sm:$0xf]
        %v315 = vld [vmem:[%s312 + $0x8] sm:$0xf]
        %v316 = vld [vmem:[%s312 + $0xc] sm:$0xf]
        %v325 = vunpack.c.l.b16 %v173
        %v326 = vunpack.c.l.b16 %v174
        %v327 = vunpack.c.l.b16 %v175
        %v328 = vunpack.c.l.b16 %v176
        %v329 = vunpack.c.l.b16 %v177
        %v330 = vunpack.c.l.b16 %v178
        %v331 = vunpack.c.l.b16 %v179
        %v332 = vunpack.c.l.b16 %v180
        %v333 = vpack.c.b16 %v326, %v325
        %v334 = vpack.c.b16 %v328, %v327
        %v335 = vpack.c.b16 %v330, %v329
        %v336 = vpack.c.b16 %v332, %v331
        %v341 = vunpack.c.l.b16 %v313
        %v342 = vunpack.c.l.b16 %v314
        %v343 = vunpack.c.l.b16 %v315
        %v344 = vunpack.c.l.b16 %v316
        %v345 = vpack.c.b16 %v342, %v341
        %v346 = vpack.c.b16 %v344, %v343
        %v350 = vsel %vm217, %v333, 0
        %v353 = vsel %vm217, %v334, 0
        %v356 = vsel %vm217, %v335, 0
        %v359 = vsel %vm217, %v336, 0
        %361 = vmatprep.subr.bf16.mxu0 0
        %362 = vmatpush1.bf16.msra.mxu0 %v345
        %363 = vmatprep.subr.bf16.mxu0 0
        %364 = vmatpush1.bf16.msra.mxu0 %v346
        %365 = vmatprep.subr.bf16.mxu0 0
        %366 = vmatpush1.bf16.msra.mxu0 0
        %367 = vmatprep.subr.bf16.mxu0 0
        %368 = vmatpush1.bf16.msra.mxu0 0
        %369 = vmatprep.subr.bf16.mxu0 0
        %370 = vmatpush1.bf16.msra.mxu0 0
        %371 = vmatprep.subr.bf16.mxu0 0
        %372 = vmatpush1.bf16.msra.mxu0 0
        %373 = vmatprep.subr.bf16.mxu0 0
        %374 = vmatpush1.bf16.msra.mxu0 0
        %375 = vmatprep.subr.bf16.mxu0 0
        %376 = vmatpush1.bf16.msra.mxu0 0
        %377 = vmatprep.subr.bf16.mxu0 0
        %378 = vmatpush1.bf16.msra.mxu0 0
        %379 = vmatprep.subr.bf16.mxu0 0
        %380 = vmatpush1.bf16.msra.mxu0 0
        %381 = vmatprep.subr.bf16.mxu0 0
        %382 = vmatpush1.bf16.msra.mxu0 0
        %383 = vmatprep.subr.bf16.mxu0 0
        %384 = vmatpush1.bf16.msra.mxu0 0
        %385 = vmatprep.subr.bf16.mxu0 0
        %386 = vmatpush1.bf16.msra.mxu0 0
        %387 = vmatprep.subr.bf16.mxu0 0
        %388 = vmatpush1.bf16.msra.mxu0 0
        %389 = vmatprep.subr.bf16.mxu0 0
        %390 = vmatpush1.bf16.msra.mxu0 0
        %391 = vmatprep.subr.bf16.mxu0 0
        %392 = vmatpush1.bf16.msra.mxu0 0
        %393 = vmatprep.mubr.bf16.mxu0 0
        %394 = vmatmul.mubr.bf16.gmra.mrb[0].mxu0 %v350
        %v395 = vpop.f32.mrb[0].mxu0
        %v396 = vadd.f32 0.0, %v395
        %v397 = vpop.f32.mrb[0].mxu0
        %v398 = vpop.f32.mrb[0].mxu0
        %v399 = vadd.f32 0.0, %v398
        %v400 = vpop.f32.mrb[0].mxu0
        %401 = vmatprep.mubr.bf16.mxu0 0
        %402 = vmatmul.mubr.bf16.gmra.mrb[0].mxu0 %v353
        %v403 = vpop.f32.mrb[0].mxu0
        %v404 = vadd.f32 0.0, %v403
        %v405 = vpop.f32.mrb[0].mxu0
        %v406 = vpop.f32.mrb[0].mxu0
        %v407 = vadd.f32 0.0, %v406
        %v408 = vpop.f32.mrb[0].mxu0
        %409 = vmatprep.mubr.bf16.mxu0 0
        %410 = vmatmul.mubr.bf16.gmra.mrb[0].mxu0 %v356
        %v411 = vpop.f32.mrb[0].mxu0
        %v412 = vadd.f32 0.0, %v411
        %v413 = vpop.f32.mrb[0].mxu0
        %v414 = vpop.f32.mrb[0].mxu0
        %v415 = vadd.f32 0.0, %v414
        %v416 = vpop.f32.mrb[0].mxu0
        %417 = vmatprep.mubr.bf16.mxu0 0
        %418 = vmatmul.mubr.bf16.gmra.mrb[0].mxu0 %v359
        %v419 = vpop.f32.mrb[0].mxu0
        %v420 = vadd.f32 0.0, %v419
        %v421 = vpop.f32.mrb[0].mxu0
        %v422 = vpop.f32.mrb[0].mxu0
        %v423 = vadd.f32 0.0, %v422
        %v424 = vpop.f32.mrb[0].mxu0
        %425 = vdwg.mxu0
        %v426 = vadd.f32 %v304, %v396
        %v427 = vadd.f32 %v305, %v399
        %v428 = vadd.f32 %v306, %v404
        %v429 = vadd.f32 %v307, %v407
        %v430 = vadd.f32 %v308, %v412
        %v431 = vadd.f32 %v309, %v415
        %v432 = vadd.f32 %v310, %v420
        %v433 = vadd.f32 %v311, %v423
        %434 = vst [vmem:[%s295] sm:$0xff] %v426
        %435 = vst [vmem:[%s295 + $0x8] sm:$0xff] %v427
        %436 = vst [vmem:[%s295 + $0x10] sm:$0xff] %v428
        %437 = vst [vmem:[%s295 + $0x18] sm:$0xff] %v429
        %438 = vst [vmem:[%s295 + $0x20] sm:$0xff] %v430
        %439 = vst [vmem:[%s295 + $0x28] sm:$0xff] %v431
        %440 = vst [vmem:[%s295 + $0x30] sm:$0xff] %v432
        %441 = vst [vmem:[%s295 + $0x38] sm:$0xff] %v433
        %p442 = scmp.eq.s32.totalorder %s21, 0
        // Predicated region
        $region29: #{tpu_custom_call.1} parent=27 // pred_check
          %p443 = pneg %p442
        $region30: #{tpu_custom_call.1} parent=27 // pred_check_branch
          %445 = sbr.rel (%p443) target = $region32
        $region31: #{tpu_custom_call.1} parent=27 // pred_region
          %446 = vst [vmem:[#allocation3] sm:$0x1] 0.0
        $region32: #{tpu_custom_call.1} parent=27 // pred_fallthru
          _
        %v447 = vld [vmem:[%s295] sm:$0xff]
        %v448 = vld [vmem:[%s295 + $0x8] sm:$0xff]
        %v449 = vld [vmem:[%s295 + $0x10] sm:$0xff]
        %v450 = vld [vmem:[%s295 + $0x18] sm:$0xff]
        %v451 = vld [vmem:[%s295 + $0x20] sm:$0xff]
        %v452 = vld [vmem:[%s295 + $0x28] sm:$0xff]
        %v453 = vld [vmem:[%s295 + $0x30] sm:$0xff]
        %v454 = vld [vmem:[%s295 + $0x38] sm:$0xff]
        %v455 = vld [vmem:[#allocation3] sm:$0x1]
        %v456 = vadd.f32 %v447, %v448
        %v457 = vadd.f32 %v456, %v449
        %v458 = vadd.f32 %v457, %v450
        %v459 = vadd.f32 %v458, %v451
        %v460 = vadd.f32 %v459, %v452
        %v461 = vadd.f32 %v460, %v453
        %v462 = vadd.f32 %v461, %v454
        %v463 = vrot.slane %v462, 4
        %v464 = vadd.f32 %v462, %v463
        %v465 = vrot.slane %v464, 2
        %v466 = vadd.f32 %v464, %v465
        %v467 = vrot.slane %v466, 1
        %v468 = vadd.f32 %v466, %v467
        %v469 = vadd.f32 %v455, %v468
        %470 = vst [vmem:[#allocation3] sm:$0x1] %v469
        // Predicated region
        $region33: #{tpu_custom_call.1} parent=27 // pred_check
          %p471 = pneg %p442
        $region34: #{tpu_custom_call.1} parent=27 // pred_check_branch
          %473 = sbr.rel (%p471) target = $region36
        $region35: #{tpu_custom_call.1} parent=27 // pred_region
          %v474 = vld [vmem:[#allocation2] sm:$0xff]
          %v475 = vld [vmem:[#allocation2 + $0x8] sm:$0xff]
          %v476 = vld [vmem:[#allocation2 + $0x10] sm:$0xff]
          %v477 = vld [vmem:[#allocation2 + $0x18] sm:$0xff]
          %v478 = vld [vmem:[#allocation2 + $0x20] sm:$0xff]
          %v479 = vld [vmem:[#allocation2 + $0x28] sm:$0xff]
          %v480 = vld [vmem:[#allocation2 + $0x30] sm:$0xff]
          %v481 = vld [vmem:[#allocation2 + $0x38] sm:$0xff]
          %v482 = vld [vmem:[#allocation3] sm:$0x1]
          %v483 = vmul.f32 %v482, 0.015625
          %v485 = vlaneseq
          %v486 = vshrl.u32 %v485, 7
          %v487 = vsub.s32 0, %v486
          %v488 = vrot.slane %v483, %v487
          %v490 = vsub.f32 %v474, %v488
          %v491 = vsub.f32 %v475, %v488
          %v492 = vsub.f32 %v476, %v488
          %v493 = vsub.f32 %v477, %v488
          %v494 = vsub.f32 %v478, %v488
          %v495 = vsub.f32 %v479, %v488
          %v496 = vsub.f32 %v480, %v488
          %v497 = vsub.f32 %v481, %v488
          %v498 = vmul.f32 %v490, %v490
          %v499 = vmul.f32 %v491, %v491
          %v500 = vmul.f32 %v492, %v492
          %v501 = vmul.f32 %v493, %v493
          %v502 = vmul.f32 %v494, %v494
          %v503 = vmul.f32 %v495, %v495
          %v504 = vmul.f32 %v496, %v496
          %v505 = vmul.f32 %v497, %v497
          %v506 = vadd.f32 %v498, %v499
          %v507 = vadd.f32 %v506, %v500
          %v508 = vadd.f32 %v507, %v501
          %v509 = vadd.f32 %v508, %v502
          %v510 = vadd.f32 %v509, %v503
          %v511 = vadd.f32 %v510, %v504
          %v512 = vadd.f32 %v511, %v505
          %v513 = vrot.slane %v512, 4
          %v514 = vadd.f32 %v512, %v513
          %v515 = vrot.slane %v514, 2
          %v516 = vadd.f32 %v514, %v515
          %v517 = vrot.slane %v516, 1
          %v518 = vadd.f32 %v516, %v517
          %v519 = vmul.f32 %v518, 0.015625
          %v520 = vadd.f32 %v519, 1e-05
          %v521 = vrsqrt.pop %v520
          %v522 = vmul.f32 %v490, %v521
          %v523 = vmul.f32 %v491, %v521
          %v524 = vmul.f32 %v492, %v521
          %v525 = vmul.f32 %v493, %v521
          %v526 = vmul.f32 %v494, %v521
          %v527 = vmul.f32 %v495, %v521
          %v528 = vmul.f32 %v496, %v521
          %v529 = vmul.f32 %v497, %v521
          %vm530 = vcmp.ge.f32.partialorder %v522, 0.0
          %vm531 = vcmp.ge.f32.partialorder %v523, 0.0
          %vm532 = vcmp.ge.f32.partialorder %v524, 0.0
          %vm533 = vcmp.ge.f32.partialorder %v525, 0.0
          %vm534 = vcmp.ge.f32.partialorder %v526, 0.0
          %vm535 = vcmp.ge.f32.partialorder %v527, 0.0
          %vm536 = vcmp.ge.f32.partialorder %v528, 0.0
          %vm537 = vcmp.ge.f32.partialorder %v529, 0.0
          %v538 = vmul.f32 %v522, 0.2
          %v539 = vmul.f32 %v523, 0.2
          %v540 = vmul.f32 %v524, 0.2
          %v541 = vmul.f32 %v525, 0.2
          %v542 = vmul.f32 %v526, 0.2
          %v543 = vmul.f32 %v527, 0.2
          %v544 = vmul.f32 %v528, 0.2
          %v545 = vmul.f32 %v529, 0.2
          %v546 = vsel %vm530, %v522, %v538
          %v547 = vsel %vm531, %v523, %v539
          %v548 = vsel %vm532, %v524, %v540
          %v549 = vsel %vm533, %v525, %v541
          %v550 = vsel %vm534, %v526, %v542
          %v551 = vsel %vm535, %v527, %v543
          %v552 = vsel %vm536, %v528, %v544
          %v553 = vsel %vm537, %v529, %v545
          %554 = vxpose.xlu0.b32.start [1/16] %v546, 128
          %555 = vxpose.xlu0.b32.cont [2/16] %v547, 128
          %556 = vxpose.xlu0.b32.cont [3/16] %v548, 128
          %557 = vxpose.xlu0.b32.cont [4/16] %v549, 128
          %558 = vxpose.xlu0.b32.cont [5/16] %v550, 128
          %559 = vxpose.xlu0.b32.cont [6/16] %v551, 128
          %560 = vxpose.xlu0.b32.cont [7/16] %v552, 128
          %561 = vxpose.xlu0.b32.cont [8/16] %v553, 128
          %562 = vxpose.xlu0.b32.cont [9/16] 0.0, 128
          %563 = vxpose.xlu0.b32.cont [10/16] 0.0, 128
          %564 = vxpose.xlu0.b32.cont [11/16] 0.0, 128
          %565 = vxpose.xlu0.b32.cont [12/16] 0.0, 128
          %566 = vxpose.xlu0.b32.cont [13/16] 0.0, 128
          %567 = vxpose.xlu0.b32.cont [14/16] 0.0, 128
          %568 = vxpose.xlu0.b32.cont [15/16] 0.0, 128
          %569 = vxpose.xlu0.b32.end [16/16] 0.0, 128
          %v570 = vpop.trf.xlu0
          %v571 = vpop.trf.xlu0
          %v572 = vpop.trf.xlu0
          %v573 = vpop.trf.xlu0
          %v574 = vpop.trf.xlu0
          %v575 = vpop.trf.xlu0
          %v576 = vpop.trf.xlu0
          %v577 = vpop.trf.xlu0
          %v578 = vpop.trf.xlu0
          %v579 = vpop.trf.xlu0
          %v580 = vpop.trf.xlu0
          %v581 = vpop.trf.xlu0
          %v582 = vpop.trf.xlu0
          %v583 = vpop.trf.xlu0
          %v584 = vpop.trf.xlu0
          %v585 = vpop.trf.xlu0
          %vm586 = vcmask 523264
          %587 = vst.msk [vmem:[%s148] sm:$0xff] %vm586, %v570
        $region36: #{tpu_custom_call.1} parent=27 // pred_fallthru
          _
        %s588 = sand.u32 %s83, 1
        %s589 = scalar_lea.sflag [#allocation5], %s588
        %s590 = sand.u32 %s83, 1
        %s591 = smul.addr %s590, 8
        %s592 = scalar_lea.vmem [#allocation4], %s591
        // Predicated region
        $region37: #{tpu_custom_call.1} parent=27 // pred_check
          %p593 = pneg %p93
        $region38: #{tpu_custom_call.1} parent=27 // pred_check_branch
          %595 = sbr.rel (%p593) target = $region40
        $region39: #{tpu_custom_call.1} parent=27 // pred_region
          %s597 = ssub.s32 128, 128
          %598 = vsyncadd %s589, %s597
          %s599 = smul.addr %s20, 128
          %s600 = scalar_lea.hbm %s2, %s599
          %s602 = sshll.u32 %s592, 4
          %s603 = int_to_ptr.vmem [resolvable:$true] %s602
          %605 = dma.vmem_to_hbm [thread:$0]  %s603, 128, %s600, %s589
        $region40: #{tpu_custom_call.1} parent=27 // pred_fallthru
          _
      $region28: #{tpu_custom_call.1} parent=5 // pred_fallthru
        _
      %p606 = scmp.le.s32.totalorder 2, %s11
      // Predicated region
      $region41: #{tpu_custom_call.1} parent=5 // pred_check
        %p607 = pneg %p606
      $region42: #{tpu_custom_call.1} parent=5 // pred_check_branch
        %609 = sbr.rel (%p607) target = $region44
      $region43: #{tpu_custom_call.1} parent=5 // pred_region
        %s610 = ssub.s32 %s11, 2
        // Predicated region
        $region45: #{tpu_custom_call.1} parent=43 // pred_check
          %p611 = pneg %p99
        $region46: #{tpu_custom_call.1} parent=43 // pred_check_branch
          %613 = sbr.rel (%p611) target = $region48
        $region47: #{tpu_custom_call.1} parent=43 // pred_region
          %s614 = sand.u32 %s84, 1
          %s615 = scalar_lea.sflag [#allocation5], %s614
          %s616 = sand.u32 %s84, 1
          %s617 = smul.addr %s616, 8
          %s618 = scalar_lea.vmem [#allocation4], %s617
          %619 = dma.done %s615, 128
        $region48: #{tpu_custom_call.1} parent=43 // pred_fallthru
          _
      $region44: #{tpu_custom_call.1} parent=5 // pred_fallthru
        _
    $region6: #{tpu_custom_call.1} parent=1 // loop_footer
      %s15 = sadd.s32 1, %s11
    $region7: #{tpu_custom_call.1} parent=1 // loop_footer_branch
      %10 = sbr.rel target = $region3
    $region8: #{tpu_custom_call.1} parent=1 // loop_exit
      _
    %620 = vsyncpa [#allocation5], 1
    %s621 = scalar_lea.sflag [#allocation5], 1
    %622 = vsyncpa %s621, 1

</llo_original>
